<compile_context>
chip_gen: v7x
topology: tpu7x:2x2x1
jax: 0.10.0
libtpu: 0.0.40
codegen_flags: <defaults>
</compile_context>

<pallas_src>
import math
import jax
import jax.numpy as jnp
from jax.experimental import pallas as pl
from jax.experimental.pallas import tpu as pltpu


# ---------------------------------------------------------------------------
# Fused kernel: gate matmuls (MXU) -> VMEM scratch -> elementwise recurrence.
# Grid = (hidden-block [parallel], time-block [arbitrary, innermost]).
# ---------------------------------------------------------------------------
def _gru_fused_kernel(x_ref, wz_ref, wn_ref, h0_ref, out_ref, ht_ref,
                      z_scr, n_scr, h_scr):
    """x_ref:  (Ts*B, I)  time-major rows of the flattened input for this tile
       wz_ref: (I, Hb)    W_iz^T hidden-block slice (f32 or bf16)
       wn_ref: (I, Hb)    W_in^T hidden-block slice (f32 or bf16)
       h0_ref: (B, Hb)    initial hidden state slice
       out_ref:(Ts*B, Hb) output rows for this (time, hidden) tile
       ht_ref: (B, Hb)    final hidden state slice (resident across time tiles)
       z_scr/n_scr: (Ts*B, Hb) f32 gate scratch;  h_scr: (B, Hb) f32 carry."""
    batch = h0_ref.shape[0]
    time_tile = x_ref.shape[0] // batch
    tb = pl.program_id(1)

    @pl.when(tb == 0)
    def _():
        h_scr[...] = h0_ref[...].astype(jnp.float32)

    # In-kernel cast of x to the (possibly bf16) weight dtype: rides a free
    # VPU slot under the MXU instead of a separate wrapper-side XLA pass.
    x = x_ref[...].astype(wz_ref.dtype)
    z_scr[...] = jax.nn.sigmoid(
        jnp.dot(x, wz_ref[...], preferred_element_type=jnp.float32))
    n_scr[...] = jnp.tanh(
        jnp.dot(x, wn_ref[...], preferred_element_type=jnp.float32))

    def step(t, h):
        r0 = pl.multiple_of(t * batch, batch)
        z_t = z_scr[pl.ds(r0, batch), :]
        n_t = n_scr[pl.ds(r0, batch), :]
        h_new = (1.0 - z_t) * n_t + z_t * h
        # n_t is dead after this step; reuse n_scr as the output-tile
        # accumulator so the HBM write below is ONE bulk lane-dense store.
        n_scr[pl.ds(r0, batch), :] = h_new
        return h_new

    h_last = jax.lax.fori_loop(0, time_tile, step, h_scr[...],
                               unroll=min(8, time_tile))
    h_scr[...] = h_last                            # carry to next time tile
    out_ref[...] = n_scr[...].astype(out_ref.dtype)
    ht_ref[...] = h_last.astype(ht_ref.dtype)      # cheap; robust final h_T


# ---------------------------------------------------------------------------
# Tiling heuristics.
# ---------------------------------------------------------------------------
def _choose_hidden_block(H):
    """MXU-friendly hidden blocks that also give a 'parallel' axis (v7x 2 TCs)
    once H is large enough; otherwise take all of H (block == full dim)."""
    for hb in (256, 128):
        if H % hb == 0 and H // hb >= 2:
            return hb
    return H


def _choose_time_tile(S, B, max_rows=512):
    """Largest Ts dividing S with (Ts*B) sublane-aligned (multiple of 8, or
    the full extent) and at most ~max_rows gate-scratch rows per tile."""
    cap = max(1, max_rows // max(B, 1))
    for ts in range(min(S, cap), 0, -1):
        if S % ts == 0 and ((ts * B) % 8 == 0 or ts == S):
            return ts
    return S


def mygru_forward(inp, h_0, weight_ih_l0, *, use_bf16_matmul=False,
                  time_tile=None):
    """inp: (S, B, I), h_0: (1, B, H), weight_ih_l0: (3H, I)."""
    S, B, I = inp.shape
    H = weight_ih_l0.shape[0] // 3

    # PyTorch GRU packs gates as (r, z, n) along dim 0 of weight_ih.
    # r is dead (module has no W_hh, so r only multiplies 0) -> dropped.
    w_z = weight_ih_l0[1 * H:2 * H, :].T          # (I, H)
    w_n = weight_ih_l0[2 * H:3 * H, :].T          # (I, H)

    # bf16 MXU inputs are valid on all generations (v5e MXU is natively bf16);
    # the recurrence / hidden-state carry stays f32 inside the kernel.
    w_dtype = jnp.bfloat16 if use_bf16_matmul else jnp.float32
    w_z = w_z.astype(w_dtype)
    w_n = w_n.astype(w_dtype)

    Hb = _choose_hidden_block(H)
    if time_tile is None:
        time_tile = _choose_time_tile(S, B)
    if S % time_tile != 0 or ((time_tile * B) % 8 != 0 and time_tile != S):
        time_tile = S                              # safe fallback
    Ts = time_tile
    nhb = H // Hb
    ntb = S // Ts

    x2d = inp.reshape(S * B, I)        # time-major rows: (t, b) -> row t*B + b
    h0_2d = h_0.reshape(B, H).astype(jnp.float32)

    out2d, ht2d = pl.pallas_call(
        _gru_fused_kernel,
        grid_spec=pltpu.PrefetchScalarGridSpec(
            num_scalar_prefetch=0,
            grid=(nhb, ntb),                       # (hidden-block, time-block)
            in_specs=[
                pl.BlockSpec((Ts * B, I), lambda hb, tb: (tb, 0)),    # x rows
                pl.BlockSpec((I, Hb), lambda hb, tb: (0, hb)),        # W_iz^T
                pl.BlockSpec((I, Hb), lambda hb, tb: (0, hb)),        # W_in^T
                pl.BlockSpec((B, Hb), lambda hb, tb: (0, hb)),        # h_0
            ],
            out_specs=[
                pl.BlockSpec((Ts * B, Hb), lambda hb, tb: (tb, hb)),  # output
                pl.BlockSpec((B, Hb), lambda hb, tb: (0, hb)),        # h_T
            ],
            scratch_shapes=[
                pltpu.VMEM((Ts * B, Hb), jnp.float32),   # z gate
                pltpu.VMEM((Ts * B, Hb), jnp.float32),   # n gate / out accum
                pltpu.VMEM((B, Hb), jnp.float32),        # h carry across tiles
            ],
        ),
        out_shape=(
            jax.ShapeDtypeStruct((S * B, H), inp.dtype),
            jax.ShapeDtypeStruct((B, H), inp.dtype),
        ),
        compiler_params=pltpu.CompilerParams(
            # hidden blocks are independent (megacore / v7x 2-TC split);
            # time is the sequential recurrence axis (innermost).
            dimension_semantics=("parallel", "arbitrary"),
            # Explicit limit with headroom for v7x (64 MiB physical VMEM).
            vmem_limit_bytes=48 * 1024 * 1024,
        ),
    )(x2d, w_z, w_n, h0_2d)

    return out2d.reshape(S, B, H), ht2d.reshape(1, B, H)


def mygru_reference(inp, h_0, weight_ih_l0):
    """Pure-JAX reference of the full intended recurrence (incl. the dead r
    gate, which provably does not affect the output since W_hh == 0)."""
    H = weight_ih_l0.shape[0] // 3
    w_r = weight_ih_l0[0 * H:1 * H, :].T
    w_z = weight_ih_l0[1 * H:2 * H, :].T
    w_n = weight_ih_l0[2 * H:3 * H, :].T

    def step(h, x):
        r = jax.nn.sigmoid(x @ w_r)            # dead: only appears as r * 0
        z = jax.nn.sigmoid(x @ w_z)
        n = jnp.tanh(x @ w_n + r * 0.0)
        h_new = (1.0 - z) * n + z * h
        return h_new, h_new

    h_last, ys = jax.lax.scan(step, h_0[0].astype(jnp.float32),
                              inp.astype(jnp.float32))
    return ys.astype(inp.dtype), h_last[None].astype(inp.dtype)


if __name__ == "__main__":
    seq_len, batch, input_size, hidden_size = 8, 4, 16, 32

    key = jax.random.PRNGKey(0)
    k_w, k_x, k_h = jax.random.split(key, 3)

    # Deterministic parameter init mirroring MyGRU.init_hidden():
    # uniform(-1/sqrt(H), 1/sqrt(H)) over (3H, I).
    stdv = 1.0 / math.sqrt(hidden_size)
    weight_ih_l0 = jax.random.uniform(
        k_w, (hidden_size * 3, input_size), jnp.float32, minval=-stdv, maxval=stdv)

    inp = jax.random.normal(k_x, (seq_len, batch, input_size), jnp.float32)
    h_0 = jax.random.normal(k_h, (1, batch, hidden_size), jnp.float32)

    out_ref, ht_ref = mygru_reference(inp, h_0, weight_ih_l0)

    # f32 path, default tiling (single time tile at these toy sizes).
    output, h_t = mygru_forward(inp, h_0, weight_ih_l0)
    jax.block_until_ready((output, h_t))
    assert output.shape == (seq_len, batch, hidden_size)
    assert h_t.shape == (1, batch, hidden_size)
    assert jnp.allclose(output, out_ref, atol=1e-5, rtol=1e-5)
    assert jnp.allclose(h_t, ht_ref, atol=1e-5, rtol=1e-5)

    # f32 path with an explicit small time tile: exercises the multi-tile
    # grid and the VMEM hidden-state carry across 'arbitrary' grid steps.
    output_t2, h_t_t2 = mygru_forward(inp, h_0, weight_ih_l0, time_tile=2)
    jax.block_until_ready((output_t2, h_t_t2))
    assert jnp.allclose(output_t2, out_ref, atol=1e-5, rtol=1e-5)
    assert jnp.allclose(h_t_t2, ht_ref, atol=1e-5, rtol=1e-5)

    # bf16 MXU path (valid on v5e/v6e/v7x); recurrence stays f32.
    output_bf16, h_t_bf16 = mygru_forward(inp, h_0, weight_ih_l0,
                                          use_bf16_matmul=True)
    jax.block_until_ready((output_bf16, h_t_bf16))
    assert jnp.allclose(output_bf16, out_ref, atol=5e-2, rtol=5e-2)
    assert jnp.allclose(h_t_bf16, ht_ref, atol=5e-2, rtol=5e-2)

    print("KERNEL_OK")
</pallas_src>

<mosaic_0001>
module attributes {stable_mosaic.version = 11 : i64} {
  func.func @_gru_fused_kernel(%arg0: i32, %arg1: i32, %arg2: memref<32x16xf32, #tpu.memory_space<vmem>>, %arg3: memref<16x32xf32, #tpu.memory_space<vmem>>, %arg4: memref<16x32xf32, #tpu.memory_space<vmem>>, %arg5: memref<4x32xf32, #tpu.memory_space<vmem>>, %arg6: memref<32x32xf32, #tpu.memory_space<vmem>>, %arg7: memref<4x32xf32, #tpu.memory_space<vmem>>, %arg8: memref<32x32xf32, #tpu.memory_space<vmem>>, %arg9: memref<32x32xf32, #tpu.memory_space<vmem>>, %arg10: memref<4x32xf32, #tpu.memory_space<vmem>>) attributes {dimension_semantics = [#tpu.dimension_semantics<parallel>, #tpu.dimension_semantics<arbitrary>], iteration_bounds = array<i64: 1, 1>, scalar_prefetch = 0 : i64, scratch_operands = 3 : i64, tpu.core_type = #tpu.core_type<tc>, window_params = [{transform_indices = @transform_0, window_bounds = array<i64: 32, 16>}, {transform_indices = @transform_1, window_bounds = array<i64: 16, 32>}, {transform_indices = @transform_2, window_bounds = array<i64: 16, 32>}, {transform_indices = @transform_3, window_bounds = array<i64: 4, 32>}, {transform_indices = @transform_4, window_bounds = array<i64: 32, 32>}, {transform_indices = @transform_5, window_bounds = array<i64: 4, 32>}]} {
    %c0_i32 = arith.constant 0 : i32
    %0 = arith.cmpi eq, %arg1, %c0_i32 : i32
    %1 = arith.extui %0 : i1 to i32
    %c0_i32_0 = arith.constant 0 : i32
    %2 = arith.cmpi ne, %1, %c0_i32_0 : i32
    scf.if %2 {
      %c0_63 = arith.constant 0 : index
      %c0_64 = arith.constant 0 : index
      %125 = vector.load %arg5[%c0_63, %c0_64] : memref<4x32xf32, #tpu.memory_space<vmem>>, vector<4x32xf32>
      %c0_65 = arith.constant 0 : index
      %c0_66 = arith.constant 0 : index
      %126 = vector.load %arg10[%c0_65, %c0_66] : memref<4x32xf32, #tpu.memory_space<vmem>>, vector<4x32xf32>
      tpu.vector_store %arg10[%c0_65, %c0_66], %125 {strides = array<i32>} : memref<4x32xf32, #tpu.memory_space<vmem>>, vector<4x32xf32>,
    } else {
    }
    %c0 = arith.constant 0 : index
    %c0_1 = arith.constant 0 : index
    %3 = vector.load %arg2[%c0, %c0_1] : memref<32x16xf32, #tpu.memory_space<vmem>>, vector<32x16xf32>
    %c0_2 = arith.constant 0 : index
    %c0_3 = arith.constant 0 : index
    %4 = vector.load %arg3[%c0_2, %c0_3] : memref<16x32xf32, #tpu.memory_space<vmem>>, vector<16x32xf32>
    %cst = arith.constant dense<0.000000e+00> : vector<32x32xf32>
    %5 = tpu.matmul %3, %4, %cst {dimension_numbers = #tpu.dot_dimension_numbers<[1], [0], [0], [1], [0, 0, 1, 1], [], []>} : vector<32x16xf32>, vector<16x32xf32>, vector<32x32xf32> -> vector<32x32xf32>
    %6 = arith.negf %5 : vector<32x32xf32>
    %7 = math.exp %6 : vector<32x32xf32>
    %cst_4 = arith.constant 1.000000e+00 : f32
    %8 = vector.broadcast %cst_4 : f32 to vector<32x32xf32>
    %9 = arith.addf %8, %7 : vector<32x32xf32>
    %10 = arith.divf %8, %9 : vector<32x32xf32>
    %c0_5 = arith.constant 0 : index
    %c0_6 = arith.constant 0 : index
    %11 = vector.load %arg8[%c0_5, %c0_6] : memref<32x32xf32, #tpu.memory_space<vmem>>, vector<32x32xf32>
    tpu.vector_store %arg8[%c0_5, %c0_6], %10 {strides = array<i32>} : memref<32x32xf32, #tpu.memory_space<vmem>>, vector<32x32xf32>,
    %c0_7 = arith.constant 0 : index
    %c0_8 = arith.constant 0 : index
    %12 = vector.load %arg4[%c0_7, %c0_8] : memref<16x32xf32, #tpu.memory_space<vmem>>, vector<16x32xf32>
    %cst_9 = arith.constant dense<0.000000e+00> : vector<32x32xf32>
    %13 = tpu.matmul %3, %12, %cst_9 {dimension_numbers = #tpu.dot_dimension_numbers<[1], [0], [0], [1], [0, 0, 1, 1], [], []>} : vector<32x16xf32>, vector<16x32xf32>, vector<32x32xf32> -> vector<32x32xf32>
    %14 = math.tanh %13 : vector<32x32xf32>
    %c0_10 = arith.constant 0 : index
    %c0_11 = arith.constant 0 : index
    %15 = vector.load %arg9[%c0_10, %c0_11] : memref<32x32xf32, #tpu.memory_space<vmem>>, vector<32x32xf32>
    tpu.vector_store %arg9[%c0_10, %c0_11], %14 {strides = array<i32>} : memref<32x32xf32, #tpu.memory_space<vmem>>, vector<32x32xf32>,
    %c0_12 = arith.constant 0 : index
    %c0_13 = arith.constant 0 : index
    %16 = vector.load %arg10[%c0_12, %c0_13] : memref<4x32xf32, #tpu.memory_space<vmem>>, vector<4x32xf32>
    %c0_i32_14 = arith.constant 0 : i32
    %c4_i32 = arith.constant 4 : i32
    %17 = arith.muli %c0_i32_14, %c4_i32 : i32
    %18 = tpu.assume_multiple %17, 4 : i32
    %19 = arith.index_cast %18 : i32 to index
    %c0_15 = arith.constant 0 : index
    %20 = vector.load %arg8[%19, %c0_15] : memref<32x32xf32, #tpu.memory_space<vmem>>, vector<4x32xf32>
    %21 = arith.index_cast %18 : i32 to index
    %c0_16 = arith.constant 0 : index
    %22 = vector.load %arg9[%21, %c0_16] : memref<32x32xf32, #tpu.memory_space<vmem>>, vector<4x32xf32>
    %cst_17 = arith.constant 1.000000e+00 : f32
    %23 = vector.broadcast %cst_17 : f32 to vector<4x32xf32>
    %24 = arith.subf %23, %20 : vector<4x32xf32>
    %25 = arith.mulf %24, %22 : vector<4x32xf32>
    %26 = arith.mulf %20, %16 : vector<4x32xf32>
    %27 = arith.addf %25, %26 : vector<4x32xf32>
    %28 = arith.index_cast %18 : i32 to index
    %c0_18 = arith.constant 0 : index
    %29 = vector.load %arg9[%28, %c0_18] : memref<32x32xf32, #tpu.memory_space<vmem>>, vector<4x32xf32>
    tpu.vector_store %arg9[%28, %c0_18], %27 {strides = array<i32>} : memref<32x32xf32, #tpu.memory_space<vmem>>, vector<4x32xf32>,
    %c1_i32 = arith.constant 1 : i32
    %c4_i32_19 = arith.constant 4 : i32
    %30 = arith.muli %c1_i32, %c4_i32_19 : i32
    %31 = tpu.assume_multiple %30, 4 : i32
    %32 = arith.index_cast %31 : i32 to index
    %c0_20 = arith.constant 0 : index
    %33 = vector.load %arg8[%32, %c0_20] : memref<32x32xf32, #tpu.memory_space<vmem>>, vector<4x32xf32>
    %34 = arith.index_cast %31 : i32 to index
    %c0_21 = arith.constant 0 : index
    %35 = vector.load %arg9[%34, %c0_21] : memref<32x32xf32, #tpu.memory_space<vmem>>, vector<4x32xf32>
    %cst_22 = arith.constant 1.000000e+00 : f32
    %36 = vector.broadcast %cst_22 : f32 to vector<4x32xf32>
    %37 = arith.subf %36, %33 : vector<4x32xf32>
    %38 = arith.mulf %37, %35 : vector<4x32xf32>
    %39 = arith.mulf %33, %27 : vector<4x32xf32>
    %40 = arith.addf %38, %39 : vector<4x32xf32>
    %41 = arith.index_cast %31 : i32 to index
    %c0_23 = arith.constant 0 : index
    %42 = vector.load %arg9[%41, %c0_23] : memref<32x32xf32, #tpu.memory_space<vmem>>, vector<4x32xf32>
    tpu.vector_store %arg9[%41, %c0_23], %40 {strides = array<i32>} : memref<32x32xf32, #tpu.memory_space<vmem>>, vector<4x32xf32>,
    %c2_i32 = arith.constant 2 : i32
    %c4_i32_24 = arith.constant 4 : i32
    %43 = arith.muli %c2_i32, %c4_i32_24 : i32
    %44 = tpu.assume_multiple %43, 4 : i32
    %45 = arith.index_cast %44 : i32 to index
    %c0_25 = arith.constant 0 : index
    %46 = vector.load %arg8[%45, %c0_25] : memref<32x32xf32, #tpu.memory_space<vmem>>, vector<4x32xf32>
    %47 = arith.index_cast %44 : i32 to index
    %c0_26 = arith.constant 0 : index
    %48 = vector.load %arg9[%47, %c0_26] : memref<32x32xf32, #tpu.memory_space<vmem>>, vector<4x32xf32>
    %cst_27 = arith.constant 1.000000e+00 : f32
    %49 = vector.broadcast %cst_27 : f32 to vector<4x32xf32>
    %50 = arith.subf %49, %46 : vector<4x32xf32>
    %51 = arith.mulf %50, %48 : vector<4x32xf32>
    %52 = arith.mulf %46, %40 : vector<4x32xf32>
    %53 = arith.addf %51, %52 : vector<4x32xf32>
    %54 = arith.index_cast %44 : i32 to index
    %c0_28 = arith.constant 0 : index
    %55 = vector.load %arg9[%54, %c0_28] : memref<32x32xf32, #tpu.memory_space<vmem>>, vector<4x32xf32>
    tpu.vector_store %arg9[%54, %c0_28], %53 {strides = array<i32>} : memref<32x32xf32, #tpu.memory_space<vmem>>, vector<4x32xf32>,
    %c3_i32 = arith.constant 3 : i32
    %c4_i32_29 = arith.constant 4 : i32
    %56 = arith.muli %c3_i32, %c4_i32_29 : i32
    %57 = tpu.assume_multiple %56, 4 : i32
    %58 = arith.index_cast %57 : i32 to index
    %c0_30 = arith.constant 0 : index
    %59 = vector.load %arg8[%58, %c0_30] : memref<32x32xf32, #tpu.memory_space<vmem>>, vector<4x32xf32>
    %60 = arith.index_cast %57 : i32 to index
    %c0_31 = arith.constant 0 : index
    %61 = vector.load %arg9[%60, %c0_31] : memref<32x32xf32, #tpu.memory_space<vmem>>, vector<4x32xf32>
    %cst_32 = arith.constant 1.000000e+00 : f32
    %62 = vector.broadcast %cst_32 : f32 to vector<4x32xf32>
    %63 = arith.subf %62, %59 : vector<4x32xf32>
    %64 = arith.mulf %63, %61 : vector<4x32xf32>
    %65 = arith.mulf %59, %53 : vector<4x32xf32>
    %66 = arith.addf %64, %65 : vector<4x32xf32>
    %67 = arith.index_cast %57 : i32 to index
    %c0_33 = arith.constant 0 : index
    %68 = vector.load %arg9[%67, %c0_33] : memref<32x32xf32, #tpu.memory_space<vmem>>, vector<4x32xf32>
    tpu.vector_store %arg9[%67, %c0_33], %66 {strides = array<i32>} : memref<32x32xf32, #tpu.memory_space<vmem>>, vector<4x32xf32>,
    %c4_i32_34 = arith.constant 4 : i32
    %c4_i32_35 = arith.constant 4 : i32
    %69 = arith.muli %c4_i32_34, %c4_i32_35 : i32
    %70 = tpu.assume_multiple %69, 4 : i32
    %71 = arith.index_cast %70 : i32 to index
    %c0_36 = arith.constant 0 : index
    %72 = vector.load %arg8[%71, %c0_36] : memref<32x32xf32, #tpu.memory_space<vmem>>, vector<4x32xf32>
    %73 = arith.index_cast %70 : i32 to index
    %c0_37 = arith.constant 0 : index
    %74 = vector.load %arg9[%73, %c0_37] : memref<32x32xf32, #tpu.memory_space<vmem>>, vector<4x32xf32>
    %cst_38 = arith.constant 1.000000e+00 : f32
    %75 = vector.broadcast %cst_38 : f32 to vector<4x32xf32>
    %76 = arith.subf %75, %72 : vector<4x32xf32>
    %77 = arith.mulf %76, %74 : vector<4x32xf32>
    %78 = arith.mulf %72, %66 : vector<4x32xf32>
    %79 = arith.addf %77, %78 : vector<4x32xf32>
    %80 = arith.index_cast %70 : i32 to index
    %c0_39 = arith.constant 0 : index
    %81 = vector.load %arg9[%80, %c0_39] : memref<32x32xf32, #tpu.memory_space<vmem>>, vector<4x32xf32>
    tpu.vector_store %arg9[%80, %c0_39], %79 {strides = array<i32>} : memref<32x32xf32, #tpu.memory_space<vmem>>, vector<4x32xf32>,
    %c5_i32 = arith.constant 5 : i32
    %c4_i32_40 = arith.constant 4 : i32
    %82 = arith.muli %c5_i32, %c4_i32_40 : i32
    %83 = tpu.assume_multiple %82, 4 : i32
    %84 = arith.index_cast %83 : i32 to index
    %c0_41 = arith.constant 0 : index
    %85 = vector.load %arg8[%84, %c0_41] : memref<32x32xf32, #tpu.memory_space<vmem>>, vector<4x32xf32>
    %86 = arith.index_cast %83 : i32 to index
    %c0_42 = arith.constant 0 : index
    %87 = vector.load %arg9[%86, %c0_42] : memref<32x32xf32, #tpu.memory_space<vmem>>, vector<4x32xf32>
    %cst_43 = arith.constant 1.000000e+00 : f32
    %88 = vector.broadcast %cst_43 : f32 to vector<4x32xf32>
    %89 = arith.subf %88, %85 : vector<4x32xf32>
    %90 = arith.mulf %89, %87 : vector<4x32xf32>
    %91 = arith.mulf %85, %79 : vector<4x32xf32>
    %92 = arith.addf %90, %91 : vector<4x32xf32>
    %93 = arith.index_cast %83 : i32 to index
    %c0_44 = arith.constant 0 : index
    %94 = vector.load %arg9[%93, %c0_44] : memref<32x32xf32, #tpu.memory_space<vmem>>, vector<4x32xf32>
    tpu.vector_store %arg9[%93, %c0_44], %92 {strides = array<i32>} : memref<32x32xf32, #tpu.memory_space<vmem>>, vector<4x32xf32>,
    %c6_i32 = arith.constant 6 : i32
    %c4_i32_45 = arith.constant 4 : i32
    %95 = arith.muli %c6_i32, %c4_i32_45 : i32
    %96 = tpu.assume_multiple %95, 4 : i32
    %97 = arith.index_cast %96 : i32 to index
    %c0_46 = arith.constant 0 : index
    %98 = vector.load %arg8[%97, %c0_46] : memref<32x32xf32, #tpu.memory_space<vmem>>, vector<4x32xf32>
    %99 = arith.index_cast %96 : i32 to index
    %c0_47 = arith.constant 0 : index
    %100 = vector.load %arg9[%99, %c0_47] : memref<32x32xf32, #tpu.memory_space<vmem>>, vector<4x32xf32>
    %cst_48 = arith.constant 1.000000e+00 : f32
    %101 = vector.broadcast %cst_48 : f32 to vector<4x32xf32>
    %102 = arith.subf %101, %98 : vector<4x32xf32>
    %103 = arith.mulf %102, %100 : vector<4x32xf32>
    %104 = arith.mulf %98, %92 : vector<4x32xf32>
    %105 = arith.addf %103, %104 : vector<4x32xf32>
    %106 = arith.index_cast %96 : i32 to index
    %c0_49 = arith.constant 0 : index
    %107 = vector.load %arg9[%106, %c0_49] : memref<32x32xf32, #tpu.memory_space<vmem>>, vector<4x32xf32>
    tpu.vector_store %arg9[%106, %c0_49], %105 {strides = array<i32>} : memref<32x32xf32, #tpu.memory_space<vmem>>, vector<4x32xf32>,
    %c7_i32 = arith.constant 7 : i32
    %c4_i32_50 = arith.constant 4 : i32
    %108 = arith.muli %c7_i32, %c4_i32_50 : i32
    %109 = tpu.assume_multiple %108, 4 : i32
    %110 = arith.index_cast %109 : i32 to index
    %c0_51 = arith.constant 0 : index
    %111 = vector.load %arg8[%110, %c0_51] : memref<32x32xf32, #tpu.memory_space<vmem>>, vector<4x32xf32>
    %112 = arith.index_cast %109 : i32 to index
    %c0_52 = arith.constant 0 : index
    %113 = vector.load %arg9[%112, %c0_52] : memref<32x32xf32, #tpu.memory_space<vmem>>, vector<4x32xf32>
    %cst_53 = arith.constant 1.000000e+00 : f32
    %114 = vector.broadcast %cst_53 : f32 to vector<4x32xf32>
    %115 = arith.subf %114, %111 : vector<4x32xf32>
    %116 = arith.mulf %115, %113 : vector<4x32xf32>
    %117 = arith.mulf %111, %105 : vector<4x32xf32>
    %118 = arith.addf %116, %117 : vector<4x32xf32>
    %119 = arith.index_cast %109 : i32 to index
    %c0_54 = arith.constant 0 : index
    %120 = vector.load %arg9[%119, %c0_54] : memref<32x32xf32, #tpu.memory_space<vmem>>, vector<4x32xf32>
    tpu.vector_store %arg9[%119, %c0_54], %118 {strides = array<i32>} : memref<32x32xf32, #tpu.memory_space<vmem>>, vector<4x32xf32>,
    %c8_i32 = arith.constant 8 : i32
    %c0_55 = arith.constant 0 : index
    %c0_56 = arith.constant 0 : index
    %121 = vector.load %arg10[%c0_55, %c0_56] : memref<4x32xf32, #tpu.memory_space<vmem>>, vector<4x32xf32>
    tpu.vector_store %arg10[%c0_55, %c0_56], %118 {strides = array<i32>} : memref<4x32xf32, #tpu.memory_space<vmem>>, vector<4x32xf32>,
    %c0_57 = arith.constant 0 : index
    %c0_58 = arith.constant 0 : index
    %122 = vector.load %arg9[%c0_57, %c0_58] : memref<32x32xf32, #tpu.memory_space<vmem>>, vector<32x32xf32>
    %c0_59 = arith.constant 0 : index
    %c0_60 = arith.constant 0 : index
    %123 = vector.load %arg6[%c0_59, %c0_60] : memref<32x32xf32, #tpu.memory_space<vmem>>, vector<32x32xf32>
    tpu.vector_store %arg6[%c0_59, %c0_60], %122 {strides = array<i32>} : memref<32x32xf32, #tpu.memory_space<vmem>>, vector<32x32xf32>,
    %c0_61 = arith.constant 0 : index
    %c0_62 = arith.constant 0 : index
    %124 = vector.load %arg7[%c0_61, %c0_62] : memref<4x32xf32, #tpu.memory_space<vmem>>, vector<4x32xf32>
    tpu.vector_store %arg7[%c0_61, %c0_62], %118 {strides = array<i32>} : memref<4x32xf32, #tpu.memory_space<vmem>>, vector<4x32xf32>,
    return
  }
  func.func @transform_0(%arg0: i32, %arg1: i32) -> (i32, i32) {
    %c0_i32 = arith.constant 0 : i32
    %c0_i32_0 = arith.constant 0 : i32
    return %arg1, %c0_i32 : i32, i32
  }
  func.func @transform_1(%arg0: i32, %arg1: i32) -> (i32, i32) {
    %c0_i32 = arith.constant 0 : i32
    %c0_i32_0 = arith.constant 0 : i32
    return %c0_i32, %arg0 : i32, i32
  }
  func.func @transform_2(%arg0: i32, %arg1: i32) -> (i32, i32) {
    %c0_i32 = arith.constant 0 : i32
    %c0_i32_0 = arith.constant 0 : i32
    return %c0_i32, %arg0 : i32, i32
  }
  func.func @transform_3(%arg0: i32, %arg1: i32) -> (i32, i32) {
    %c0_i32 = arith.constant 0 : i32
    %c0_i32_0 = arith.constant 0 : i32
    return %c0_i32, %arg0 : i32, i32
  }
  func.func @transform_4(%arg0: i32, %arg1: i32) -> (i32, i32) {
    %c0_i32 = arith.constant 0 : i32
    return %arg1, %arg0 : i32, i32
  }
  func.func @transform_5(%arg0: i32, %arg1: i32) -> (i32, i32) {
    %c0_i32 = arith.constant 0 : i32
    %c0_i32_0 = arith.constant 0 : i32
    return %c0_i32, %arg0 : i32, i32
  }
}

</mosaic_0001>

<llo_original>
// kernel: tpu_custom_call.1
$region0: #{tpu_custom_call.1}
  #allocation0 [shape = 'u32[]', space=smem, size = 0x4, offset = 0x4, fixed_abs, tag = 'smem constant byte address 0x4 - core index']
  #allocation1 [shape = 'u32[144,128]{1,0:T(1,128)}', space=vmem, size = 0x12000, scoped, tag = 'internal scratch']
  #allocation2 [shape = 'f32[32,32]{1,0:T(8,128)}', space=vmem, size = 0x4000, scoped, tag = 'scratch operand']
  #allocation3 [shape = 'f32[32,32]{1,0:T(8,128)}', space=vmem, size = 0x4000, scoped, tag = 'scratch operand']
  #allocation4 [shape = 'f32[4,32]{1,0:T(4,128)}', space=vmem, size = 0x800, scoped, tag = 'scratch operand']
  %s0 = inlined_call_operand.vmem [shape: f32[32,16], index: 0, kind: input, shape index: {}]
  %s1 = inlined_call_operand.vmem [shape: f32[16,32], index: 1, kind: input, shape index: {}]
  %s2 = inlined_call_operand.vmem [shape: f32[16,32], index: 2, kind: input, shape index: {}]
  %s3 = inlined_call_operand.vmem [shape: f32[4,32], index: 3, kind: input, shape index: {}]
  %s4 = inlined_call_operand.hbm [shape: f32[32,32], index: 4, kind: output, shape index: {0}]
  %s5 = inlined_call_operand.hbm [shape: f32[4,32], index: 5, kind: output, shape index: {1}]
  %6 = xla_tuple %s4, %s5
  %s7 = sld [smem:[#allocation0]]
  $region38: #{tpu_custom_call.1} parent=0
    _
  %s9 = ssub.s32 1, %s7
  %s10 = scalar_select 0, %s9, %s7
  $region1: #{tpu_custom_call.1} parent=0
    #allocation5 [shape = 'u8[16384]{0}', space=vmem, size = 0x4000, scoped, tag = 'output window, operand 0, single buffered']
    #allocation6 [shape = 's32[1]{0}', space=sflag, size = 0x4, scoped, tag = 'scoped memory for tpu_custom_call.1']
    #allocation7 [shape = 'u8[2048]{0}', space=vmem, size = 0x800, scoped, tag = 'output window, operand 1, single buffered']
    #allocation8 [shape = 's32[1]{0}', space=sflag, size = 0x4, scoped, tag = 'scoped memory for tpu_custom_call.1']
    %11 = vsyncpa [#allocation6], 0
    %12 = vsyncpa [#allocation8], 0
    // Predicated region
    $region2: #{tpu_custom_call.1} parent=1 // pred_check
      _
    $region3: #{tpu_custom_call.1} parent=1 // pred_check_branch
      %14 = sbr.rel (0) target = $region5
    $region4: #{tpu_custom_call.1} parent=1 // pred_region
      _
    $region5: #{tpu_custom_call.1} parent=1 // pred_fallthru
      _
    // Predicated region
    $region6: #{tpu_custom_call.1} parent=1 // pred_check
      _
    $region7: #{tpu_custom_call.1} parent=1 // pred_check_branch
      %16 = sbr.rel (0) target = $region9
    $region8: #{tpu_custom_call.1} parent=1 // pred_region
      _
    $region9: #{tpu_custom_call.1} parent=1 // pred_fallthru
      _
    // Predicated region
    $region10: #{tpu_custom_call.1} parent=1 // pred_check
      _
    $region11: #{tpu_custom_call.1} parent=1 // pred_check_branch
      %18 = sbr.rel (0) target = $region13
    $region12: #{tpu_custom_call.1} parent=1 // pred_region
      _
    $region13: #{tpu_custom_call.1} parent=1 // pred_fallthru
      _
    // Predicated region
    $region14: #{tpu_custom_call.1} parent=1 // pred_check
      _
    $region15: #{tpu_custom_call.1} parent=1 // pred_check_branch
      %20 = sbr.rel (0) target = $region17
    $region16: #{tpu_custom_call.1} parent=1 // pred_region
      _
    $region17: #{tpu_custom_call.1} parent=1 // pred_fallthru
      _
    %p21 = scmp.eq.s32.totalorder 0, 0
    // Predicated region
    $region18: #{tpu_custom_call.1} parent=1 // pred_check
      %p22 = pneg %p21
    $region19: #{tpu_custom_call.1} parent=1 // pred_check_branch
      %24 = sbr.rel (%p22) target = $region21
    $region20: #{tpu_custom_call.1} parent=1 // pred_region
      %v25 = vld [vmem:[%s3] sm:$0xf]
      %vm26 = vcmask 257024
      %27 = vst.msk [vmem:[#allocation4] sm:$0xf] %vm26, %v25
    $region21: #{tpu_custom_call.1} parent=1 // pred_fallthru
      _
    %v28 = vld [vmem:[%s0] sm:$0xff]
    %v29 = vld [vmem:[%s0 + $0x8] sm:$0xff]
    %v30 = vld [vmem:[%s0 + $0x10] sm:$0xff]
    %v31 = vld [vmem:[%s0 + $0x18] sm:$0xff]
    %v32 = vld [vmem:[%s1] sm:$0xff]
    %v33 = vld [vmem:[%s1 + $0x8] sm:$0xff]
    %vm34 = vcmask 130048
    %v36 = vsel %vm34, %v28, 0
    %v39 = vsel %vm34, %v29, 0
    %v42 = vsel %vm34, %v30, 0
    %v45 = vsel %vm34, %v31, 0
    %47 = vmatprep.subr.mxu0 0.0
    %48 = vmatpush1.msra.mxu0 %v32
    %49 = vmatprep.subr.mxu0 0.0
    %50 = vmatpush1.msra.mxu0 %v33
    %51 = vmatprep.subr.mxu0 0.0
    %52 = vmatpush1.msra.mxu0 0.0
    %53 = vmatprep.subr.mxu0 0.0
    %54 = vmatpush1.msra.mxu0 0.0
    %55 = vmatprep.subr.mxu0 0.0
    %56 = vmatpush1.msra.mxu0 0.0
    %57 = vmatprep.subr.mxu0 0.0
    %58 = vmatpush1.msra.mxu0 0.0
    %59 = vmatprep.subr.mxu0 0.0
    %60 = vmatpush1.msra.mxu0 0.0
    %61 = vmatprep.subr.mxu0 0.0
    %62 = vmatpush1.msra.mxu0 0.0
    %63 = vmatprep.subr.mxu0 0.0
    %64 = vmatpush1.msra.mxu0 0.0
    %65 = vmatprep.subr.mxu0 0.0
    %66 = vmatpush1.msra.mxu0 0.0
    %67 = vmatprep.subr.mxu0 0.0
    %68 = vmatpush1.msra.mxu0 0.0
    %69 = vmatprep.subr.mxu0 0.0
    %70 = vmatpush1.msra.mxu0 0.0
    %71 = vmatprep.subr.mxu0 0.0
    %72 = vmatpush1.msra.mxu0 0.0
    %73 = vmatprep.subr.mxu0 0.0
    %74 = vmatpush1.msra.mxu0 0.0
    %75 = vmatprep.subr.mxu0 0.0
    %76 = vmatpush1.msra.mxu0 0.0
    %77 = vmatprep.subr.mxu0 0.0
    %78 = vmatpush1.msra.mxu0 0.0
    %79 = vmatprep.subr.mxu0 0.0
    %80 = vmatpush1.msra.mxu0 0.0
    %81 = vmatprep.subr.mxu0 0.0
    %82 = vmatpush1.msra.mxu0 0.0
    %83 = vmatprep.subr.mxu0 0.0
    %84 = vmatpush1.msra.mxu0 0.0
    %85 = vmatprep.subr.mxu0 0.0
    %86 = vmatpush1.msra.mxu0 0.0
    %87 = vmatprep.subr.mxu0 0.0
    %88 = vmatpush1.msra.mxu0 0.0
    %89 = vmatprep.subr.mxu0 0.0
    %90 = vmatpush1.msra.mxu0 0.0
    %91 = vmatprep.subr.mxu0 0.0
    %92 = vmatpush1.msra.mxu0 0.0
    %93 = vmatprep.subr.mxu0 0.0
    %94 = vmatpush1.msra.mxu0 0.0
    %95 = vmatprep.subr.mxu0 0.0
    %96 = vmatpush1.msra.mxu0 0.0
    %97 = vmatprep.subr.mxu0 0.0
    %98 = vmatpush1.msra.mxu0 0.0
    %99 = vmatprep.subr.mxu0 0.0
    %100 = vmatpush1.msra.mxu0 0.0
    %101 = vmatprep.subr.mxu0 0.0
    %102 = vmatpush1.msra.mxu0 0.0
    %103 = vmatprep.subr.mxu0 0.0
    %104 = vmatpush1.msra.mxu0 0.0
    %105 = vmatprep.subr.mxu0 0.0
    %106 = vmatpush1.msra.mxu0 0.0
    %107 = vmatprep.subr.mxu0 0.0
    %108 = vmatpush1.msra.mxu0 0.0
    %109 = vmatprep.subr.mxu0 0.0
    %110 = vmatpush1.msra.mxu0 0.0
    %111 = vmatprep.mubr.f32.mxu0 0.0
    %112 = vmatmul.mubr.f32.gmra.mrb[0].mxu0 %v36
    %v113 = vpop.f32.mrb[0].mxu0
    %v114 = vadd.f32 0.0, %v113
    %v115 = vpop.f32.mrb[0].mxu0
    %116 = vmatprep.mubr.f32.mxu0 0.0
    %117 = vmatmul.mubr.f32.gmra.mrb[0].mxu0 %v39
    %v118 = vpop.f32.mrb[0].mxu0
    %v119 = vadd.f32 0.0, %v118
    %v120 = vpop.f32.mrb[0].mxu0
    %121 = vmatprep.mubr.f32.mxu0 0.0
    %122 = vmatmul.mubr.f32.gmra.mrb[0].mxu0 %v42
    %v123 = vpop.f32.mrb[0].mxu0
    %v124 = vadd.f32 0.0, %v123
    %v125 = vpop.f32.mrb[0].mxu0
    %126 = vmatprep.mubr.f32.mxu0 0.0
    %127 = vmatmul.mubr.f32.gmra.mrb[0].mxu0 %v45
    %v128 = vpop.f32.mrb[0].mxu0
    %v129 = vadd.f32 0.0, %v128
    %v130 = vpop.f32.mrb[0].mxu0
    %131 = vdwg.mxu0
    %v132 = vxor.u32 %v114, 2147483648
    %v133 = vxor.u32 %v119, 2147483648
    %v134 = vxor.u32 %v124, 2147483648
    %v135 = vxor.u32 %v129, 2147483648
    %v136 = vmul.f32 %v132, 1.442695
    %v137 = vpow.pop %v136
    %v138 = vmul.f32 %v133, 1.442695
    %v139 = vpow.pop %v138
    %v140 = vmul.f32 %v134, 1.442695
    %v141 = vpow.pop %v140
    %v142 = vmul.f32 %v135, 1.442695
    %v143 = vpow.pop %v142
    %v144 = vadd.f32 %v137, 1.0
    %v145 = vadd.f32 %v139, 1.0
    %v146 = vadd.f32 %v141, 1.0
    %v147 = vadd.f32 %v143, 1.0
    %v148 = vrcp.pop %v144
    %v149 = vmul.f32 1.0, %v148
    %v150 = vrcp.pop %v145
    %v151 = vmul.f32 1.0, %v150
    %v152 = vrcp.pop %v146
    %v153 = vmul.f32 1.0, %v152
    %v154 = vrcp.pop %v147
    %v155 = vmul.f32 1.0, %v154
    %vm156 = vcmask 261120
    %157 = vst.msk [vmem:[#allocation2] sm:$0xff] %vm156, %v149
    %158 = vst.msk [vmem:[#allocation2 + $0x8] sm:$0xff] %vm156, %v151
    %159 = vst.msk [vmem:[#allocation2 + $0x10] sm:$0xff] %vm156, %v153
    %160 = vst.msk [vmem:[#allocation2 + $0x18] sm:$0xff] %vm156, %v155
    %v161 = vld [vmem:[%s2] sm:$0xff]
    %v162 = vld [vmem:[%s2 + $0x8] sm:$0xff]
    %163 = vmatprep.subr.mxu0 0.0
    %164 = vmatpush1.msra.mxu0 %v161
    %165 = vmatprep.subr.mxu0 0.0
    %166 = vmatpush1.msra.mxu0 %v162
    %167 = vmatprep.subr.mxu0 0.0
    %168 = vmatpush1.msra.mxu0 0.0
    %169 = vmatprep.subr.mxu0 0.0
    %170 = vmatpush1.msra.mxu0 0.0
    %171 = vmatprep.subr.mxu0 0.0
    %172 = vmatpush1.msra.mxu0 0.0
    %173 = vmatprep.subr.mxu0 0.0
    %174 = vmatpush1.msra.mxu0 0.0
    %175 = vmatprep.subr.mxu0 0.0
    %176 = vmatpush1.msra.mxu0 0.0
    %177 = vmatprep.subr.mxu0 0.0
    %178 = vmatpush1.msra.mxu0 0.0
    %179 = vmatprep.subr.mxu0 0.0
    %180 = vmatpush1.msra.mxu0 0.0
    %181 = vmatprep.subr.mxu0 0.0
    %182 = vmatpush1.msra.mxu0 0.0
    %183 = vmatprep.subr.mxu0 0.0
    %184 = vmatpush1.msra.mxu0 0.0
    %185 = vmatprep.subr.mxu0 0.0
    %186 = vmatpush1.msra.mxu0 0.0
    %187 = vmatprep.subr.mxu0 0.0
    %188 = vmatpush1.msra.mxu0 0.0
    %189 = vmatprep.subr.mxu0 0.0
    %190 = vmatpush1.msra.mxu0 0.0
    %191 = vmatprep.subr.mxu0 0.0
    %192 = vmatpush1.msra.mxu0 0.0
    %193 = vmatprep.subr.mxu0 0.0
    %194 = vmatpush1.msra.mxu0 0.0
    %195 = vmatprep.subr.mxu0 0.0
    %196 = vmatpush1.msra.mxu0 0.0
    %197 = vmatprep.subr.mxu0 0.0
    %198 = vmatpush1.msra.mxu0 0.0
    %199 = vmatprep.subr.mxu0 0.0
    %200 = vmatpush1.msra.mxu0 0.0
    %201 = vmatprep.subr.mxu0 0.0
    %202 = vmatpush1.msra.mxu0 0.0
    %203 = vmatprep.subr.mxu0 0.0
    %204 = vmatpush1.msra.mxu0 0.0
    %205 = vmatprep.subr.mxu0 0.0
    %206 = vmatpush1.msra.mxu0 0.0
    %207 = vmatprep.subr.mxu0 0.0
    %208 = vmatpush1.msra.mxu0 0.0
    %209 = vmatprep.subr.mxu0 0.0
    %210 = vmatpush1.msra.mxu0 0.0
    %211 = vmatprep.subr.mxu0 0.0
    %212 = vmatpush1.msra.mxu0 0.0
    %213 = vmatprep.subr.mxu0 0.0
    %214 = vmatpush1.msra.mxu0 0.0
    %215 = vmatprep.subr.mxu0 0.0
    %216 = vmatpush1.msra.mxu0 0.0
    %217 = vmatprep.subr.mxu0 0.0
    %218 = vmatpush1.msra.mxu0 0.0
    %219 = vmatprep.subr.mxu0 0.0
    %220 = vmatpush1.msra.mxu0 0.0
    %221 = vmatprep.subr.mxu0 0.0
    %222 = vmatpush1.msra.mxu0 0.0
    %223 = vmatprep.subr.mxu0 0.0
    %224 = vmatpush1.msra.mxu0 0.0
    %225 = vmatprep.subr.mxu0 0.0
    %226 = vmatpush1.msra.mxu0 0.0
    %227 = vmatprep.mubr.f32.mxu0 0.0
    %228 = vmatmul.mubr.f32.gmra.mrb[0].mxu0 %v36
    %v229 = vpop.f32.mrb[0].mxu0
    %v230 = vadd.f32 0.0, %v229
    %v231 = vpop.f32.mrb[0].mxu0
    %232 = vmatprep.mubr.f32.mxu0 0.0
    %233 = vmatmul.mubr.f32.gmra.mrb[0].mxu0 %v39
    %v234 = vpop.f32.mrb[0].mxu0
    %v235 = vadd.f32 0.0, %v234
    %v236 = vpop.f32.mrb[0].mxu0
    %237 = vmatprep.mubr.f32.mxu0 0.0
    %238 = vmatmul.mubr.f32.gmra.mrb[0].mxu0 %v42
    %v239 = vpop.f32.mrb[0].mxu0
    %v240 = vadd.f32 0.0, %v239
    %v241 = vpop.f32.mrb[0].mxu0
    %242 = vmatprep.mubr.f32.mxu0 0.0
    %243 = vmatmul.mubr.f32.gmra.mrb[0].mxu0 %v45
    %v244 = vpop.f32.mrb[0].mxu0
    %v245 = vadd.f32 0.0, %v244
    %v246 = vpop.f32.mrb[0].mxu0
    %247 = vdwg.mxu0
    %v248 = vtanh.pop %v230
    %v249 = vtanh.pop %v235
    %v250 = vtanh.pop %v240
    %v251 = vtanh.pop %v245
    %252 = vst.msk [vmem:[#allocation3] sm:$0xff] %vm156, %v248
    %253 = vst.msk [vmem:[#allocation3 + $0x8] sm:$0xff] %vm156, %v249
    %254 = vst.msk [vmem:[#allocation3 + $0x10] sm:$0xff] %vm156, %v250
    %255 = vst.msk [vmem:[#allocation3 + $0x18] sm:$0xff] %vm156, %v251
    %v256 = vld [vmem:[#allocation4] sm:$0xf]
    %v257 = vld [vmem:[#allocation2] sm:$0xf]
    %v258 = vld [vmem:[#allocation3] sm:$0xf]
    %v259 = vsub.f32 1.0, %v257
    %v260 = vmul.f32 %v259, %v258
    %v261 = vmul.f32 %v257, %v256
    %v262 = vadd.f32 %v260, %v261
    %vm263 = vcmask 257024
    %264 = vst.msk [vmem:[#allocation3] sm:$0xf] %vm263, %v262
    %s265 = scalar_lea.vmem [#allocation2], 4
    %v266 = vld [vmem:[%s265] sm:$0xf]
    %s267 = scalar_lea.vmem [#allocation3], 4
    %v268 = vld [vmem:[%s267] sm:$0xf]
    %v269 = vsub.f32 1.0, %v266
    %v270 = vmul.f32 %v269, %v268
    %v271 = vmul.f32 %v266, %v262
    %v272 = vadd.f32 %v270, %v271
    %273 = vst.msk [vmem:[%s267] sm:$0xf] %vm263, %v272
    %s274 = scalar_lea.vmem [#allocation2], 8
    %v275 = vld [vmem:[%s274] sm:$0xf]
    %s276 = scalar_lea.vmem [#allocation3], 8
    %v277 = vld [vmem:[%s276] sm:$0xf]
    %v278 = vsub.f32 1.0, %v275
    %v279 = vmul.f32 %v278, %v277
    %v280 = vmul.f32 %v275, %v272
    %v281 = vadd.f32 %v279, %v280
    %282 = vst.msk [vmem:[%s276] sm:$0xf] %vm263, %v281
    %s283 = scalar_lea.vmem [#allocation2], 12
    %v284 = vld [vmem:[%s283] sm:$0xf]
    %s285 = scalar_lea.vmem [#allocation3], 12
    %v286 = vld [vmem:[%s285] sm:$0xf]
    %v287 = vsub.f32 1.0, %v284
    %v288 = vmul.f32 %v287, %v286
    %v289 = vmul.f32 %v284, %v281
    %v290 = vadd.f32 %v288, %v289
    %291 = vst.msk [vmem:[%s285] sm:$0xf] %vm263, %v290
    %s292 = scalar_lea.vmem [#allocation2], 16
    %v293 = vld [vmem:[%s292] sm:$0xf]
    %s294 = scalar_lea.vmem [#allocation3], 16
    %v295 = vld [vmem:[%s294] sm:$0xf]
    %v296 = vsub.f32 1.0, %v293
    %v297 = vmul.f32 %v296, %v295
    %v298 = vmul.f32 %v293, %v290
    %v299 = vadd.f32 %v297, %v298
    %300 = vst.msk [vmem:[%s294] sm:$0xf] %vm263, %v299
    %s301 = scalar_lea.vmem [#allocation2], 20
    %v302 = vld [vmem:[%s301] sm:$0xf]
    %s303 = scalar_lea.vmem [#allocation3], 20
    %v304 = vld [vmem:[%s303] sm:$0xf]
    %v305 = vsub.f32 1.0, %v302
    %v306 = vmul.f32 %v305, %v304
    %v307 = vmul.f32 %v302, %v299
    %v308 = vadd.f32 %v306, %v307
    %309 = vst.msk [vmem:[%s303] sm:$0xf] %vm263, %v308
    %s310 = scalar_lea.vmem [#allocation2], 24
    %v311 = vld [vmem:[%s310] sm:$0xf]
    %s312 = scalar_lea.vmem [#allocation3], 24
    %v313 = vld [vmem:[%s312] sm:$0xf]
    %v314 = vsub.f32 1.0, %v311
    %v315 = vmul.f32 %v314, %v313
    %v316 = vmul.f32 %v311, %v308
    %v317 = vadd.f32 %v315, %v316
    %318 = vst.msk [vmem:[%s312] sm:$0xf] %vm263, %v317
    %s319 = scalar_lea.vmem [#allocation2], 28
    %v320 = vld [vmem:[%s319] sm:$0xf]
    %s321 = scalar_lea.vmem [#allocation3], 28
    %v322 = vld [vmem:[%s321] sm:$0xf]
    %v323 = vsub.f32 1.0, %v320
    %v324 = vmul.f32 %v323, %v322
    %v325 = vmul.f32 %v320, %v317
    %v326 = vadd.f32 %v324, %v325
    %327 = vst.msk [vmem:[%s321] sm:$0xf] %vm263, %v326
    %328 = vst.msk [vmem:[#allocation4] sm:$0xf] %vm263, %v326
    %v329 = vld [vmem:[#allocation3] sm:$0xff]
    %v330 = vld [vmem:[#allocation3 + $0x8] sm:$0xff]
    %v331 = vld [vmem:[#allocation3 + $0x10] sm:$0xff]
    %v332 = vld [vmem:[#allocation3 + $0x18] sm:$0xff]
    %333 = vst.msk [vmem:[#allocation5] sm:$0xff] %vm156, %v329
    %334 = vst.msk [vmem:[#allocation5 + $0x8] sm:$0xff] %vm156, %v330
    %335 = vst.msk [vmem:[#allocation5 + $0x10] sm:$0xff] %vm156, %v331
    %336 = vst.msk [vmem:[#allocation5 + $0x18] sm:$0xff] %vm156, %v332
    %337 = vst.msk [vmem:[#allocation7] sm:$0xf] %vm263, %v326
    // Predicated region
    $region22: #{tpu_custom_call.1} parent=1 // pred_check
      _
    $region23: #{tpu_custom_call.1} parent=1 // pred_check_branch
      %339 = sbr.rel (0) target = $region25
    $region24: #{tpu_custom_call.1} parent=1 // pred_region
      %s341 = ssub.s32 512, 512
      %342 = vsyncadd [#allocation6], %s341
      %s343 = sshll.u32 [#allocation5], 4
      %s344 = int_to_ptr.vmem [resolvable:$true] %s343
      %349 = dma.vmem_to_hbm [thread:$0]  %s344, 512, %s4, [#allocation6], 128, 128, 8
    $region25: #{tpu_custom_call.1} parent=1 // pred_fallthru
      _
    // Predicated region
    $region26: #{tpu_custom_call.1} parent=1 // pred_check
      _
    $region27: #{tpu_custom_call.1} parent=1 // pred_check_branch
      %351 = sbr.rel (0) target = $region29
    $region28: #{tpu_custom_call.1} parent=1 // pred_region
      %s353 = ssub.s32 64, 64
      %354 = vsyncadd [#allocation8], %s353
      %s356 = sshll.u32 [#allocation7], 4
      %s357 = int_to_ptr.vmem [resolvable:$true] %s356
      %359 = dma.vmem_to_hbm [thread:$0]  %s357, 64, %s5, [#allocation8]
    $region29: #{tpu_custom_call.1} parent=1 // pred_fallthru
      _
    // Predicated region
    $region30: #{tpu_custom_call.1} parent=1 // pred_check
      _
    $region31: #{tpu_custom_call.1} parent=1 // pred_check_branch
      %361 = sbr.rel (0) target = $region33
    $region32: #{tpu_custom_call.1} parent=1 // pred_region
      %362 = dma.done [#allocation6], 512
    $region33: #{tpu_custom_call.1} parent=1 // pred_fallthru
      _
    // Predicated region
    $region34: #{tpu_custom_call.1} parent=1 // pred_check
      _
    $region35: #{tpu_custom_call.1} parent=1 // pred_check_branch
      %364 = sbr.rel (0) target = $region37
    $region36: #{tpu_custom_call.1} parent=1 // pred_region
      %365 = dma.done [#allocation8], 64
    $region37: #{tpu_custom_call.1} parent=1 // pred_fallthru
      _
    %366 = vsyncpa [#allocation6], 1
    %367 = vsyncpa [#allocation8], 1

</llo_original>
